<compile_context>
chip_gen: v5e
topology: v5e:2x2
jax: 0.10.0
libtpu: 0.0.40
codegen_flags: <defaults>
</compile_context>

<pallas_src>
import functools
import math

import numpy as np
import jax
import jax.numpy as jnp
from jax import lax
from jax.experimental import pallas as pl
from jax.experimental.pallas import tpu as pltpu


def _round_up(x: int, m: int) -> int:
    return ((x + m - 1) // m) * m


# -----------------------------------------------------------------------------
# Deterministic parameter init (mirrors init_kernels() for win_type='hamming')
# -----------------------------------------------------------------------------
@functools.lru_cache(maxsize=None)
def make_stft_weight(win_len: int, fft_len: int) -> np.ndarray:
    n = np.arange(win_len)
    # scipy.signal.get_window('hamming', win_len, fftbins=True)  (periodic)
    window = 0.54 - 0.46 * np.cos(2.0 * np.pi * n / win_len)
    fourier_basis = np.fft.rfft(np.eye(fft_len))[:win_len]          # (win_len, fft//2+1)
    kernel = np.concatenate([fourier_basis.real, fourier_basis.imag], axis=1).T
    kernel = kernel * window                                         # (fft_len+2, win_len)
    return kernel.astype(np.float32)


@functools.lru_cache(maxsize=None)
def _packed_weights(win_len, fft_len, g, r_g, dim8):
    """Channel-major weight slabs (r_g, dim8, g): slab jj holds window taps
    [jj*g, (jj+1)*g); channels are zero-padded dim -> dim8 so padded output rows
    stay exactly zero (finite mags/phase in the padded region)."""
    w = make_stft_weight(win_len, fft_len)            # (2*dim, win_len)
    dim = fft_len // 2 + 1

    def pack(part):                                    # part: (dim, win_len)
        slabs = part.reshape(dim, r_g, g).transpose(1, 0, 2)   # (r_g, dim, g)
        out = np.zeros((r_g, dim8, g), np.float32)
        out[:, :dim, :] = slabs
        return jnp.asarray(out)

    return pack(w[:dim]), pack(w[dim:])


# -----------------------------------------------------------------------------
# Pallas kernel
# -----------------------------------------------------------------------------
_PI = float(np.pi)
_NT = (((1,), (1,)), ((), ()))   # contract minor dims: (m, k) x (n, k) -> (m, n)


def _atan2(y, x):
    """Branch-free f32 atan2 from always-lowering VPU ops (no fallback path).
    Odd minimax polynomial (A&S 4.4.48), |err| <= 1e-5 rad; atan2(0, 0) := 0."""
    ax, ay = jnp.abs(x), jnp.abs(y)
    mx = jnp.maximum(ax, ay)
    mn = jnp.minimum(ax, ay)
    t = jnp.where(mx > 0.0, mn / mx, 0.0)              # ratio in [0, 1]
    s = t * t
    p = jnp.float32(0.0208351)
    p = p * s + jnp.float32(-0.0851330)
    p = p * s + jnp.float32(0.1801410)
    p = p * s + jnp.float32(-0.3302995)
    p = p * s + jnp.float32(0.9998660)
    a = t * p
    a = jnp.where(ay > ax, jnp.float32(0.5 * _PI) - a, a)   # octant fold
    a = jnp.where(x < 0.0, jnp.float32(_PI) - a, a)         # left half-plane
    return jnp.where(y < 0.0, -a, a)                         # sign from y


def _stft_kernel(seg_ref, wr_ref, wi_ref, mags_ref, phase_ref, *, tile_f, r_g, s_g):
    # seg_ref : (1, n_segs, g)     segment matrix of the padded signal (this batch)
    # w*_ref  : (r_g, dim8, g)     channel-major weight slabs (real / imag)
    # outputs : (1, dim8, tile_f)  NCL tile (channels x frames), lane-dense stores
    dim8 = mags_ref.shape[1]
    base = pl.multiple_of(pl.program_id(1) * (tile_f * s_g), 128)
    acc_r = jnp.zeros((dim8, tile_f), jnp.float32)
    acc_i = jnp.zeros((dim8, tile_f), jnp.float32)
    for jj in range(r_g):                               # static, r_g = win_len // gcd
        if s_g == 1:
            sl = pl.ds(base + jj, tile_f)
        else:
            # TODO(synk): strided sublane slice path (hop does not divide win_len)
            # is untested on real hardware configs; common STFT hops use s_g == 1.
            sl = pl.ds(base + jj, tile_f, stride=s_g)
        x = seg_ref[0, sl, :]                           # (tile_f, g) frame slab
        # weights (dim8, g) x frames (tile_f, g), contracted on g -> (dim8, tile_f)
        acc_r = acc_r + lax.dot_general(wr_ref[jj], x, _NT,
                                        preferred_element_type=jnp.float32)
        acc_i = acc_i + lax.dot_general(wi_ref[jj], x, _NT,
                                        preferred_element_type=jnp.float32)
    # TODO(synk): optional bf16 output dtype would halve writeback on v5e.
    mags_ref[0] = jnp.sqrt(acc_r * acc_r + acc_i * acc_i)
    phase_ref[0] = _atan2(acc_i, acc_r)


# -----------------------------------------------------------------------------
# Wrapper reproducing ConvSTFT.forward (feature_type='real')
# -----------------------------------------------------------------------------
def conv_stft(x, win_len, win_inc, fft_len=None, tile_f=1024):
    """x: (B, T) or (B, 1, T) float. Returns (mags, phase), each (B, fft//2+1, F)."""
    if x.ndim == 3:                                     # (B, 1, T) -> (B, T)
        x = x[:, 0, :]
    if fft_len is None:
        fft_len = int(2 ** math.ceil(math.log2(win_len)))
    B, T = x.shape
    stride = win_inc
    pad = win_len - stride
    Tp = T + 2 * pad
    F = (Tp - win_len) // stride + 1
    dim = fft_len // 2 + 1
    dim8 = _round_up(dim, 8)                            # 8-granular channel padding

    g = math.gcd(win_len, stride)                       # segment granule
    r_g = win_len // g
    s_g = stride // g

    # Frame tile = output lane dim (multiple of 128); prefer >= 2 tiles when there
    # are enough frames so both v7x TensorCores get work even at batch 1.
    tile = max(128, min(tile_f, _round_up(pl.cdiv(F, 2), 128)))
    tile = min(tile, _round_up(F, 128))
    n_tiles = pl.cdiv(F, tile)
    f_pad = n_tiles * tile

    # Segment matrix: seg[b, m, s] = xp[b, m*g + s]  (pure pad+reshape, no gather).
    # TODO(synk): for very long clips, window the segment axis (extra grid dim or
    # manual DMA) instead of keeping the whole per-batch signal resident in VMEM.
    n_segs = max((f_pad - 1) * s_g + r_g, pl.cdiv(Tp, g))
    n_segs = _round_up(n_segs, 8)
    total = n_segs * g
    xp = jnp.pad(x.astype(jnp.float32), ((0, 0), (pad, total - T - pad)))
    seg = xp.reshape(B, n_segs, g)

    wr, wi = _packed_weights(win_len, fft_len, g, r_g, dim8)

    kernel = functools.partial(_stft_kernel, tile_f=tile, r_g=r_g, s_g=s_g)
    out_sds = jax.ShapeDtypeStruct((B, dim8, f_pad), jnp.float32)
    mags_p, phase_p = pl.pallas_call(
        kernel,
        grid=(B, n_tiles),
        in_specs=[
            # whole per-batch segment matrix; constant frame-tile index -> re-DMA'd
            # only when the batch index changes.
            pl.BlockSpec((1, n_segs, g), lambda b, j: (b, 0, 0)),
            # weight slabs: constant block index -> fetched once per call.
            # TODO(synk): single-buffer the weights (pl.Buffered(1) / VMEM-resident)
            # to reclaim the idle second pipeline buffer (~win_len*dim8*4 bytes).
            pl.BlockSpec((r_g, dim8, g), lambda b, j: (0, 0, 0)),
            pl.BlockSpec((r_g, dim8, g), lambda b, j: (0, 0, 0)),
        ],
        out_specs=[
            pl.BlockSpec((1, dim8, tile), lambda b, j: (b, 0, j)),
            pl.BlockSpec((1, dim8, tile), lambda b, j: (b, 0, j)),
        ],
        out_shape=[out_sds, out_sds],
        compiler_params=pltpu.CompilerParams(
            dimension_semantics=("parallel", "parallel"),
        ),
    )(seg, wr, wi)

    # Only a crop remains (8-pad channels, frame-tile pad); no reshape/transpose pass.
    return mags_p[:, :dim, :F], phase_p[:, :dim, :F]


# -----------------------------------------------------------------------------
# Pure-JAX reference (conv1d, NCH) for a correctness check
# -----------------------------------------------------------------------------
def conv_stft_reference(x, weight, win_len, stride, fft_len):
    pad = win_len - stride
    xp = jnp.pad(x, ((0, 0), (pad, pad)))[:, None, :]             # (B, 1, Tp)
    out = lax.conv_general_dilated(
        xp, weight[:, None, :], window_strides=(stride,), padding="VALID",
        dimension_numbers=("NCH", "OIH", "NCH"))                  # (B, fft_len+2, F)
    dim = fft_len // 2 + 1
    real, imag = out[:, :dim, :], out[:, dim:, :]
    return jnp.sqrt(real ** 2 + imag ** 2), jnp.arctan2(imag, real)


if __name__ == "__main__":
    B, T = 2, 64
    win_len, win_inc, fft_len = 32, 16, 32

    key = jax.random.PRNGKey(0)
    x = jax.random.normal(key, (B, T), dtype=jnp.float32)

    mags, phase = conv_stft(x, win_len, win_inc, fft_len)
    jax.block_until_ready((mags, phase))

    dim = fft_len // 2 + 1
    F = (T + 2 * (win_len - win_inc) - win_len) // win_inc + 1
    assert mags.shape == (B, dim, F) and phase.shape == (B, dim, F)

    weight = jnp.asarray(make_stft_weight(win_len, fft_len))       # (fft_len+2, win_len)
    ref_mags, ref_phase = conv_stft_reference(x, weight, win_len, win_inc, fft_len)
    np.testing.assert_allclose(np.asarray(mags), np.asarray(ref_mags),
                               atol=2e-3, rtol=2e-3)
    # phase compared modulo 2*pi (DC/Nyquist bins have ~0 imag part -> +/-pi ambiguity)
    d = np.asarray(phase) - np.asarray(ref_phase)
    wrapped = np.abs(np.arctan2(np.sin(d), np.cos(d)))
    assert float(wrapped.max()) < 2e-2

    print("KERNEL_OK")
</pallas_src>

<mosaic_0001>
module attributes {stable_mosaic.version = 11 : i64} {
  func.func @_stft_kernel(%arg0: i32, %arg1: i32, %arg2: memref<1x136x16xf32, #tpu.memory_space<vmem>>, %arg3: memref<2x24x16xf32, #tpu.memory_space<vmem>>, %arg4: memref<2x24x16xf32, #tpu.memory_space<vmem>>, %arg5: memref<1x24x128xf32, #tpu.memory_space<vmem>>, %arg6: memref<1x24x128xf32, #tpu.memory_space<vmem>>) attributes {dimension_semantics = [#tpu.dimension_semantics<parallel>, #tpu.dimension_semantics<parallel>], iteration_bounds = array<i64: 2, 1>, scalar_prefetch = 0 : i64, scratch_operands = 0 : i64, tpu.core_type = #tpu.core_type<tc>, window_params = [{transform_indices = @transform_0, window_bounds = array<i64: 1, 136, 16>}, {pipeline_mode = #tpu.pipeline_mode<synchronous>, transform_indices = @transform_1, window_bounds = array<i64: 2, 24, 16>}, {pipeline_mode = #tpu.pipeline_mode<synchronous>, transform_indices = @transform_2, window_bounds = array<i64: 2, 24, 16>}, {transform_indices = @transform_3, window_bounds = array<i64: 1, 24, 128>}, {transform_indices = @transform_4, window_bounds = array<i64: 1, 24, 128>}]} {
    %c128_i32 = arith.constant 128 : i32
    %0 = arith.muli %arg1, %c128_i32 : i32
    %1 = tpu.assume_multiple %0, 128 : i32
    %cst = arith.constant 0.000000e+00 : f32
    %2 = vector.broadcast %cst : f32 to vector<24x128xf32>
    %cst_0 = arith.constant 0.000000e+00 : f32
    %3 = vector.broadcast %cst_0 : f32 to vector<24x128xf32>
    %c0_i32 = arith.constant 0 : i32
    %4 = arith.addi %1, %c0_i32 : i32
    %c0 = arith.constant 0 : index
    %5 = arith.index_cast %4 : i32 to index
    %c0_1 = arith.constant 0 : index
    %6 = vector.load %arg2[%c0, %5, %c0_1] : memref<1x136x16xf32, #tpu.memory_space<vmem>>, vector<1x128x16xf32>
    %7 = vector.shape_cast %6 : vector<1x128x16xf32> to vector<128x16xf32>
    %c0_2 = arith.constant 0 : index
    %c0_3 = arith.constant 0 : index
    %c0_4 = arith.constant 0 : index
    %8 = vector.load %arg3[%c0_2, %c0_3, %c0_4] : memref<2x24x16xf32, #tpu.memory_space<vmem>>, vector<1x24x16xf32>
    %9 = vector.shape_cast %8 : vector<1x24x16xf32> to vector<24x16xf32>
    %cst_5 = arith.constant dense<0.000000e+00> : vector<24x128xf32>
    %10 = tpu.matmul %9, %7, %cst_5 {dimension_numbers = #tpu.dot_dimension_numbers<[1], [1], [0], [0], [0, 0, 1, 0], [], []>} : vector<24x16xf32>, vector<128x16xf32>, vector<24x128xf32> -> vector<24x128xf32>
    %11 = arith.addf %2, %10 : vector<24x128xf32>
    %c0_6 = arith.constant 0 : index
    %c0_7 = arith.constant 0 : index
    %c0_8 = arith.constant 0 : index
    %12 = vector.load %arg4[%c0_6, %c0_7, %c0_8] : memref<2x24x16xf32, #tpu.memory_space<vmem>>, vector<1x24x16xf32>
    %13 = vector.shape_cast %12 : vector<1x24x16xf32> to vector<24x16xf32>
    %cst_9 = arith.constant dense<0.000000e+00> : vector<24x128xf32>
    %14 = tpu.matmul %13, %7, %cst_9 {dimension_numbers = #tpu.dot_dimension_numbers<[1], [1], [0], [0], [0, 0, 1, 0], [], []>} : vector<24x16xf32>, vector<128x16xf32>, vector<24x128xf32> -> vector<24x128xf32>
    %15 = arith.addf %3, %14 : vector<24x128xf32>
    %c1_i32 = arith.constant 1 : i32
    %16 = arith.addi %1, %c1_i32 : i32
    %c0_10 = arith.constant 0 : index
    %17 = arith.index_cast %16 : i32 to index
    %c0_11 = arith.constant 0 : index
    %18 = vector.load %arg2[%c0_10, %17, %c0_11] : memref<1x136x16xf32, #tpu.memory_space<vmem>>, vector<1x128x16xf32>
    %19 = vector.shape_cast %18 : vector<1x128x16xf32> to vector<128x16xf32>
    %c1 = arith.constant 1 : index
    %c0_12 = arith.constant 0 : index
    %c0_13 = arith.constant 0 : index
    %20 = vector.load %arg3[%c1, %c0_12, %c0_13] : memref<2x24x16xf32, #tpu.memory_space<vmem>>, vector<1x24x16xf32>
    %21 = vector.shape_cast %20 : vector<1x24x16xf32> to vector<24x16xf32>
    %cst_14 = arith.constant dense<0.000000e+00> : vector<24x128xf32>
    %22 = tpu.matmul %21, %19, %cst_14 {dimension_numbers = #tpu.dot_dimension_numbers<[1], [1], [0], [0], [0, 0, 1, 0], [], []>} : vector<24x16xf32>, vector<128x16xf32>, vector<24x128xf32> -> vector<24x128xf32>
    %23 = arith.addf %11, %22 : vector<24x128xf32>
    %c1_15 = arith.constant 1 : index
    %c0_16 = arith.constant 0 : index
    %c0_17 = arith.constant 0 : index
    %24 = vector.load %arg4[%c1_15, %c0_16, %c0_17] : memref<2x24x16xf32, #tpu.memory_space<vmem>>, vector<1x24x16xf32>
    %25 = vector.shape_cast %24 : vector<1x24x16xf32> to vector<24x16xf32>
    %cst_18 = arith.constant dense<0.000000e+00> : vector<24x128xf32>
    %26 = tpu.matmul %25, %19, %cst_18 {dimension_numbers = #tpu.dot_dimension_numbers<[1], [1], [0], [0], [0, 0, 1, 0], [], []>} : vector<24x16xf32>, vector<128x16xf32>, vector<24x128xf32> -> vector<24x128xf32>
    %27 = arith.addf %15, %26 : vector<24x128xf32>
    %28 = arith.mulf %23, %23 : vector<24x128xf32>
    %29 = arith.mulf %27, %27 : vector<24x128xf32>
    %30 = arith.addf %28, %29 : vector<24x128xf32>
    %31 = math.sqrt %30 : vector<24x128xf32>
    %c0_19 = arith.constant 0 : index
    %c0_20 = arith.constant 0 : index
    %c0_21 = arith.constant 0 : index
    %32 = vector.load %arg5[%c0_19, %c0_20, %c0_21] : memref<1x24x128xf32, #tpu.memory_space<vmem>>, vector<1x24x128xf32>
    %33 = vector.shape_cast %32 : vector<1x24x128xf32> to vector<24x128xf32>
    %34 = vector.shape_cast %31 : vector<24x128xf32> to vector<1x24x128xf32>
    tpu.vector_store %arg5[%c0_19, %c0_20, %c0_21], %34 {strides = array<i32>} : memref<1x24x128xf32, #tpu.memory_space<vmem>>, vector<1x24x128xf32>,
    %35 = math.absf %23 : vector<24x128xf32>
    %36 = math.absf %27 : vector<24x128xf32>
    %37 = arith.maximumf %35, %36 : vector<24x128xf32>
    %38 = arith.minimumf %35, %36 : vector<24x128xf32>
    %cst_22 = arith.constant 0.000000e+00 : f32
    %39 = vector.broadcast %cst_22 : f32 to vector<24x128xf32>
    %40 = arith.cmpf ogt, %37, %39 : vector<24x128xf32>
    %41 = arith.divf %38, %37 : vector<24x128xf32>
    %cst_23 = arith.constant 0.000000e+00 : f32
    %42 = vector.broadcast %cst_23 : f32 to vector<24x128xf32>
    %43 = arith.select %40, %41, %42 : vector<24x128xi1>, vector<24x128xf32>
    %44 = arith.mulf %43, %43 : vector<24x128xf32>
    %cst_24 = arith.constant 2.083510e-02 : f32
    %45 = vector.broadcast %cst_24 : f32 to vector<24x128xf32>
    %46 = arith.mulf %45, %44 : vector<24x128xf32>
    %cst_25 = arith.constant -8.513300e-02 : f32
    %47 = vector.broadcast %cst_25 : f32 to vector<24x128xf32>
    %48 = arith.addf %46, %47 : vector<24x128xf32>
    %49 = arith.mulf %48, %44 : vector<24x128xf32>
    %cst_26 = arith.constant 1.801410e-01 : f32
    %50 = vector.broadcast %cst_26 : f32 to vector<24x128xf32>
    %51 = arith.addf %49, %50 : vector<24x128xf32>
    %52 = arith.mulf %51, %44 : vector<24x128xf32>
    %cst_27 = arith.constant -0.330299497 : f32
    %53 = vector.broadcast %cst_27 : f32 to vector<24x128xf32>
    %54 = arith.addf %52, %53 : vector<24x128xf32>
    %55 = arith.mulf %54, %44 : vector<24x128xf32>
    %cst_28 = arith.constant 9.998660e-01 : f32
    %56 = vector.broadcast %cst_28 : f32 to vector<24x128xf32>
    %57 = arith.addf %55, %56 : vector<24x128xf32>
    %58 = arith.mulf %43, %57 : vector<24x128xf32>
    %59 = arith.cmpf ogt, %36, %35 : vector<24x128xf32>
    %cst_29 = arith.constant 1.57079637 : f32
    %60 = vector.broadcast %cst_29 : f32 to vector<24x128xf32>
    %61 = arith.subf %60, %58 : vector<24x128xf32>
    %62 = arith.select %59, %61, %58 : vector<24x128xi1>, vector<24x128xf32>
    %cst_30 = arith.constant 0.000000e+00 : f32
    %63 = vector.broadcast %cst_30 : f32 to vector<24x128xf32>
    %64 = arith.cmpf olt, %23, %63 : vector<24x128xf32>
    %cst_31 = arith.constant 3.14159274 : f32
    %65 = vector.broadcast %cst_31 : f32 to vector<24x128xf32>
    %66 = arith.subf %65, %62 : vector<24x128xf32>
    %67 = arith.select %64, %66, %62 : vector<24x128xi1>, vector<24x128xf32>
    %cst_32 = arith.constant 0.000000e+00 : f32
    %68 = vector.broadcast %cst_32 : f32 to vector<24x128xf32>
    %69 = arith.cmpf olt, %27, %68 : vector<24x128xf32>
    %cst_33 = arith.constant 0.000000e+00 : f32
    %70 = vector.broadcast %cst_33 : f32 to vector<24x128xf32>
    %71 = arith.subf %70, %67 : vector<24x128xf32>
    %72 = arith.select %69, %71, %67 : vector<24x128xi1>, vector<24x128xf32>
    %c0_34 = arith.constant 0 : index
    %c0_35 = arith.constant 0 : index
    %c0_36 = arith.constant 0 : index
    %73 = vector.load %arg6[%c0_34, %c0_35, %c0_36] : memref<1x24x128xf32, #tpu.memory_space<vmem>>, vector<1x24x128xf32>
    %74 = vector.shape_cast %73 : vector<1x24x128xf32> to vector<24x128xf32>
    %75 = vector.shape_cast %72 : vector<24x128xf32> to vector<1x24x128xf32>
    tpu.vector_store %arg6[%c0_34, %c0_35, %c0_36], %75 {strides = array<i32>} : memref<1x24x128xf32, #tpu.memory_space<vmem>>, vector<1x24x128xf32>,
    return
  }
  func.func @transform_0(%arg0: i32, %arg1: i32) -> (i32, i32, i32) {
    %c0_i32 = arith.constant 0 : i32
    %c0_i32_0 = arith.constant 0 : i32
    %c0_i32_1 = arith.constant 0 : i32
    return %arg0, %c0_i32, %c0_i32_0 : i32, i32, i32
  }
  func.func @transform_1(%arg0: i32, %arg1: i32) -> (i32, i32, i32) {
    %c0_i32 = arith.constant 0 : i32
    %c0_i32_0 = arith.constant 0 : i32
    %c0_i32_1 = arith.constant 0 : i32
    %c0_i32_2 = arith.constant 0 : i32
    return %c0_i32, %c0_i32_0, %c0_i32_1 : i32, i32, i32
  }
  func.func @transform_2(%arg0: i32, %arg1: i32) -> (i32, i32, i32) {
    %c0_i32 = arith.constant 0 : i32
    %c0_i32_0 = arith.constant 0 : i32
    %c0_i32_1 = arith.constant 0 : i32
    %c0_i32_2 = arith.constant 0 : i32
    return %c0_i32, %c0_i32_0, %c0_i32_1 : i32, i32, i32
  }
  func.func @transform_3(%arg0: i32, %arg1: i32) -> (i32, i32, i32) {
    %c0_i32 = arith.constant 0 : i32
    %c0_i32_0 = arith.constant 0 : i32
    return %arg0, %c0_i32, %arg1 : i32, i32, i32
  }
  func.func @transform_4(%arg0: i32, %arg1: i32) -> (i32, i32, i32) {
    %c0_i32 = arith.constant 0 : i32
    %c0_i32_0 = arith.constant 0 : i32
    return %arg0, %c0_i32, %arg1 : i32, i32, i32
  }
}

</mosaic_0001>

<llo_original>
// kernel: tpu_custom_call.1
$region0: #{tpu_custom_call.1}
  #allocation0 [shape = 'u32[]', space=smem, size = 0x4, offset = 0x4, fixed_abs, tag = 'smem constant byte address 0x4 - core index']
  #allocation1 [shape = 'u32[72,128]{1,0:T(1,128)}', space=vmem, size = 0x9000, scoped, tag = 'internal scratch']
  %s0 = inlined_call_operand.vmem [shape: f32[2,136,16], index: 0, kind: input, shape index: {}]
  %s1 = inlined_call_operand.vmem [shape: f32[2,24,16], index: 1, kind: input, shape index: {}]
  %s2 = inlined_call_operand.vmem [shape: f32[2,24,16], index: 2, kind: input, shape index: {}]
  %s3 = inlined_call_operand.hbm [shape: f32[2,24,128], index: 3, kind: output, shape index: {0}]
  %s4 = inlined_call_operand.hbm [shape: f32[2,24,128], index: 4, kind: output, shape index: {1}]
  %5 = xla_tuple %s3, %s4
  %s6 = sld [smem:[#allocation0]]
  $region53: #{tpu_custom_call.1} parent=0
    _
  %s8 = ssub.s32 1, %s6
  %s9 = scalar_select 0, %s8, %s6
  $region1: #{tpu_custom_call.1} parent=0
    #allocation2 [shape = 'u8[24576]{0}', space=vmem, size = 0x6000, scoped, tag = 'output window, operand 0']
    #allocation3 [shape = 's32[2]{0}', space=sflag, size = 0x8, scoped, tag = 'scoped memory for tpu_custom_call.1']
    #allocation4 [shape = 'u8[24576]{0}', space=vmem, size = 0x6000, scoped, tag = 'output window, operand 1']
    #allocation5 [shape = 's32[2]{0}', space=sflag, size = 0x8, scoped, tag = 'scoped memory for tpu_custom_call.1']
    %10 = vsyncpa [#allocation3], 0
    %s11 = scalar_lea.sflag [#allocation3], 1
    %12 = vsyncpa %s11, 0
    %13 = vsyncpa [#allocation5], 0
    %s14 = scalar_lea.sflag [#allocation5], 1
    %15 = vsyncpa %s14, 0
    loop: start=0, step=1, limit=4
    $region2: #{tpu_custom_call.1} parent=1 // loop_pre_header
      _
    $region3: #{tpu_custom_call.1} parent=1 // loop_header
      %s17 = sphi 0, %s21
      %p18 = scmp.ge.s32.totalorder %s17, 4
      %s24 = sphi 0, %s36
      %s25 = sphi 0, %s32
      %s26 = sphi 0, %s24
      %s27 = sphi 0, %s25
      %s28 = sphi 0, %s26
      %s29 = sphi 0, %s27
      %s39 = sphi 0, %s41
      %s42 = sphi 0, %s39
      %s43 = sphi 0, %s42
      %s59 = sphi 0, %s43
      %s63 = sphi 0, %s63
      %s65 = sphi 0, %s63
      %s66 = sphi 0, %s65
      %s80 = sphi 0, %s66
      %s84 = sphi 0, %s84
      %s86 = sphi 0, %s84
      %s87 = sphi 0, %s86
      %s101 = sphi 0, %s87
      %s109 = sphi 0, %s111
      %s112 = sphi 0, %s109
      %s113 = sphi 0, %s112
      %s129 = sphi 0, %s113
      %s137 = sphi 0, %s139
      %s140 = sphi 0, %s137
      %s141 = sphi 0, %s140
      %s157 = sphi 0, %s141
    $region4: #{tpu_custom_call.1} parent=1 // loop_header_branch
      %20 = sbr.rel (%p18) target = $region8
    $region5: #{tpu_custom_call.1} parent=1 // loop_body
      %s22 = ssub.s32 %s17, 1
      %s23 = ssub.s32 %s17, 2
      %s30 = sadd.s32 1, %s25
      %p31 = scmp.ge.s32.totalorder %s30, 1
      %s32 = scalar_select %p31, 0, %s30
      %s33 = sadd.s32 1, %s24
      %s34 = scalar_select %p31, %s33, %s24
      %p35 = scmp.ge.s32.totalorder %s34, 2
      %s36 = scalar_select %p35, 0, %s34
      %s37 = ssub.s32 %s24, %s36
      %p38 = scmp.eq.s32.totalorder %s37, 0
      %s40 = sadd.s32 %s39, 1
      %s41 = scalar_select %p38, %s39, %s40
      %p44 = pneg %p38
      %p45 = scmp.eq.s32.totalorder %s17, 1
      %p46 = por %p44, %p45
      %p47 = scmp.ne.s32.totalorder %s39, %s42
      %p48 = scmp.eq.s32.totalorder %s17, 0
      %p49 = por %p47, %p48
      %p50 = scmp.ne.s32.totalorder %s39, %s42
      %p51 = scmp.eq.s32.totalorder %s22, 1
      %p52 = por %p50, %p51
      %p53 = scmp.ne.s32.totalorder %s42, %s43
      %p54 = scmp.eq.s32.totalorder %s22, 0
      %p55 = por %p53, %p54
      %p56 = scmp.ne.s32.totalorder %s42, %s43
      %p57 = scmp.eq.s32.totalorder %s23, 1
      %p58 = por %p56, %p57
      %p60 = scmp.ne.s32.totalorder %s43, %s59
      %p61 = scmp.eq.s32.totalorder %s23, 0
      %p62 = por %p60, %p61
      %s64 = sadd.s32 %s63, 1
      %p67 = scmp.eq.s32.totalorder %s17, 1
      %p68 = scmp.ne.s32.totalorder %s63, %s65
      %p69 = scmp.eq.s32.totalorder %s17, 0
      %p70 = por %p68, %p69
      %p71 = scmp.ne.s32.totalorder %s63, %s65
      %p72 = scmp.eq.s32.totalorder %s22, 1
      %p73 = por %p71, %p72
      %p74 = scmp.ne.s32.totalorder %s65, %s66
      %p75 = scmp.eq.s32.totalorder %s22, 0
      %p76 = por %p74, %p75
      %p77 = scmp.ne.s32.totalorder %s65, %s66
      %p78 = scmp.eq.s32.totalorder %s23, 1
      %p79 = por %p77, %p78
      %p81 = scmp.ne.s32.totalorder %s66, %s80
      %p82 = scmp.eq.s32.totalorder %s23, 0
      %p83 = por %p81, %p82
      %s85 = sadd.s32 %s84, 1
      %p88 = scmp.eq.s32.totalorder %s17, 1
      %p89 = scmp.ne.s32.totalorder %s84, %s86
      %p90 = scmp.eq.s32.totalorder %s17, 0
      %p91 = por %p89, %p90
      %p92 = scmp.ne.s32.totalorder %s84, %s86
      %p93 = scmp.eq.s32.totalorder %s22, 1
      %p94 = por %p92, %p93
      %p95 = scmp.ne.s32.totalorder %s86, %s87
      %p96 = scmp.eq.s32.totalorder %s22, 0
      %p97 = por %p95, %p96
      %p98 = scmp.ne.s32.totalorder %s86, %s87
      %p99 = scmp.eq.s32.totalorder %s23, 1
      %p100 = por %p98, %p99
      %p102 = scmp.ne.s32.totalorder %s87, %s101
      %p103 = scmp.eq.s32.totalorder %s23, 0
      %p104 = por %p102, %p103
      %s105 = ssub.s32 %s24, %s36
      %s106 = ssub.s32 %s25, %s32
      %s107 = sor.u32 %s105, %s106
      %p108 = scmp.eq.s32.totalorder %s107, 0
      %s110 = sadd.s32 %s109, 1
      %s111 = scalar_select %p108, %s109, %s110
      %p114 = pneg %p108
      %p115 = scmp.eq.s32.totalorder %s17, 1
      %p116 = por %p114, %p115
      %p117 = scmp.ne.s32.totalorder %s109, %s112
      %p118 = scmp.eq.s32.totalorder %s17, 0
      %p119 = por %p117, %p118
      %p120 = scmp.ne.s32.totalorder %s109, %s112
      %p121 = scmp.eq.s32.totalorder %s22, 1
      %p122 = por %p120, %p121
      %p123 = scmp.ne.s32.totalorder %s112, %s113
      %p124 = scmp.eq.s32.totalorder %s22, 0
      %p125 = por %p123, %p124
      %p126 = scmp.ne.s32.totalorder %s112, %s113
      %p127 = scmp.eq.s32.totalorder %s23, 1
      %p128 = por %p126, %p127
      %p130 = scmp.ne.s32.totalorder %s113, %s129
      %p131 = scmp.eq.s32.totalorder %s23, 0
      %p132 = por %p130, %p131
      %s133 = ssub.s32 %s24, %s36
      %s134 = ssub.s32 %s25, %s32
      %s135 = sor.u32 %s133, %s134
      %p136 = scmp.eq.s32.totalorder %s135, 0
      %s138 = sadd.s32 %s137, 1
      %s139 = scalar_select %p136, %s137, %s138
      %p142 = pneg %p136
      %p143 = scmp.eq.s32.totalorder %s17, 1
      %p144 = por %p142, %p143
      %p145 = scmp.ne.s32.totalorder %s137, %s140
      %p146 = scmp.eq.s32.totalorder %s17, 0
      %p147 = por %p145, %p146
      %p148 = scmp.ne.s32.totalorder %s137, %s140
      %p149 = scmp.eq.s32.totalorder %s22, 1
      %p150 = por %p148, %p149
      %p151 = scmp.ne.s32.totalorder %s140, %s141
      %p152 = scmp.eq.s32.totalorder %s22, 0
      %p153 = por %p151, %p152
      %p154 = scmp.ne.s32.totalorder %s140, %s141
      %p155 = scmp.eq.s32.totalorder %s23, 1
      %p156 = por %p154, %p155
      %p158 = scmp.ne.s32.totalorder %s141, %s157
      %p159 = scmp.eq.s32.totalorder %s23, 0
      %p160 = por %p158, %p159
      %p161 = scmp.le.s32.totalorder 1, %s17
      %p162 = scmp.lt.s32.totalorder %s17, 3
      %p163 = pnand %p161, %p162
      %p164 = pneg %p163
      // Predicated region
      $region9: #{tpu_custom_call.1} parent=5 // pred_check
        _
      $region10: #{tpu_custom_call.1} parent=5 // pred_check_branch
        %166 = sbr.rel (%p163) target = $region12
      $region11: #{tpu_custom_call.1} parent=5 // pred_region
        %s167 = ssub.s32 %s17, 1
        // Predicated region
        $region13: #{tpu_custom_call.1} parent=11 // pred_check
          %p168 = pneg %p76
        $region14: #{tpu_custom_call.1} parent=11 // pred_check_branch
          %170 = sbr.rel (%p168) target = $region16
        $region15: #{tpu_custom_call.1} parent=11 // pred_region
          _
        $region16: #{tpu_custom_call.1} parent=11 // pred_fallthru
          _
        // Predicated region
        $region17: #{tpu_custom_call.1} parent=11 // pred_check
          %p171 = pneg %p97
        $region18: #{tpu_custom_call.1} parent=11 // pred_check_branch
          %173 = sbr.rel (%p171) target = $region20
        $region19: #{tpu_custom_call.1} parent=11 // pred_region
          _
        $region20: #{tpu_custom_call.1} parent=11 // pred_fallthru
          _
      $region12: #{tpu_custom_call.1} parent=5 // pred_fallthru
        _
      %p174 = scmp.lt.s32.totalorder %s17, 2
      // Predicated region
      $region21: #{tpu_custom_call.1} parent=5 // pred_check
        %p175 = pneg %p174
      $region22: #{tpu_custom_call.1} parent=5 // pred_check_branch
        %177 = sbr.rel (%p175) target = $region24
      $region23: #{tpu_custom_call.1} parent=5 // pred_region
        // Predicated region
        $region25: #{tpu_custom_call.1} parent=23 // pred_check
          %p178 = pneg %p49
        $region26: #{tpu_custom_call.1} parent=23 // pred_check_branch
          %180 = sbr.rel (%p178) target = $region28
        $region27: #{tpu_custom_call.1} parent=23 // pred_region
          %p181 = scmp.lt.s32.totalorder %s24, 1
          %s182 = scalar_select %p181, %s24, 1
          %s183 = smul.addr %s182, 17
          %s184 = smul.addr %s183, 8
          %s185 = scalar_lea.vmem %s0, %s184
        $region28: #{tpu_custom_call.1} parent=23 // pred_fallthru
          _
      $region24: #{tpu_custom_call.1} parent=5 // pred_fallthru
        _
      %p186 = scmp.le.s32.totalorder 1, %s17
      %p187 = scmp.lt.s32.totalorder %s17, 3
      %p188 = pnand %p186, %p187
      %p189 = pneg %p188
      // Predicated region
      $region29: #{tpu_custom_call.1} parent=5 // pred_check
        _
      $region30: #{tpu_custom_call.1} parent=5 // pred_check_branch
        %191 = sbr.rel (%p188) target = $region32
      $region31: #{tpu_custom_call.1} parent=5 // pred_region
        %s192 = ssub.s32 %s17, 1
        %p193 = scmp.lt.s32.totalorder %s26, 1
        %s194 = scalar_select %p193, %s26, 1
        %s195 = smul.addr %s194, 17
        %s196 = smul.addr %s195, 8
        %s197 = scalar_lea.vmem %s0, %s196
        %p198 = pneg %p55
        %p199 = pneg %p52
        %p200 = pneg %p76
        %p201 = pneg %p73
        %p202 = pneg %p97
        %p203 = pneg %p94
        %p204 = pneg %p125
        %p205 = pneg %p122
        %s206 = sand.u32 %s112, 1
        %s207 = scalar_lea.sflag [#allocation3], %s206
        %s208 = sand.u32 %s112, 1
        %s209 = smul.addr %s208, 24
        %s210 = scalar_lea.vmem [#allocation2], %s209
        %p211 = pneg %p153
        %p212 = pneg %p150
        %s213 = sand.u32 %s140, 1
        %s214 = scalar_lea.sflag [#allocation5], %s213
        %s215 = sand.u32 %s140, 1
        %s216 = smul.addr %s215, 24
        %s217 = scalar_lea.vmem [#allocation4], %s216
        %p218 = scmp.lt.s32.totalorder %s26, 1
        %s219 = scalar_select %p218, %s26, 1
        %s220 = smul.addr %s219, 17
        %s221 = smul.addr %s220, 8
        %s222 = scalar_lea.vmem %s0, %s221
        %s223 = smul.u32 %s27, 128
        %s224 = scalar_lea.vmem %s222, %s223
        %v225 = vld [vmem:[%s224] sm:$0xff]
        %v226 = vld [vmem:[%s224 + $0x8] sm:$0xff]
        %v227 = vld [vmem:[%s224 + $0x10] sm:$0xff]
        %v228 = vld [vmem:[%s224 + $0x18] sm:$0xff]
        %v229 = vld [vmem:[%s224 + $0x20] sm:$0xff]
        %v230 = vld [vmem:[%s224 + $0x28] sm:$0xff]
        %v231 = vld [vmem:[%s224 + $0x30] sm:$0xff]
        %v232 = vld [vmem:[%s224 + $0x38] sm:$0xff]
        %v233 = vld [vmem:[%s224 + $0x40] sm:$0xff]
        %v234 = vld [vmem:[%s224 + $0x48] sm:$0xff]
        %v235 = vld [vmem:[%s224 + $0x50] sm:$0xff]
        %v236 = vld [vmem:[%s224 + $0x58] sm:$0xff]
        %v237 = vld [vmem:[%s224 + $0x60] sm:$0xff]
        %v238 = vld [vmem:[%s224 + $0x68] sm:$0xff]
        %v239 = vld [vmem:[%s224 + $0x70] sm:$0xff]
        %v240 = vld [vmem:[%s224 + $0x78] sm:$0xff]
        %v241 = vld [vmem:[%s1] sm:$0xff]
        %v242 = vld [vmem:[%s1 + $0x8] sm:$0xff]
        %v243 = vld [vmem:[%s1 + $0x10] sm:$0xff]
        %v244 = vld [vmem:[%s2] sm:$0xff]
        %v245 = vld [vmem:[%s2 + $0x8] sm:$0xff]
        %v246 = vld [vmem:[%s2 + $0x10] sm:$0xff]
        %s247 = sadd.s32 %s223, 1
        %s248 = scalar_lea.vmem %s222, %s247
        %v249 = vld [vmem:[%s248] sm:$0xff]
        %v250 = vld [vmem:[%s248 + $0x8] sm:$0xff]
        %v251 = vld [vmem:[%s248 + $0x10] sm:$0xff]
        %v252 = vld [vmem:[%s248 + $0x18] sm:$0xff]
        %v253 = vld [vmem:[%s248 + $0x20] sm:$0xff]
        %v254 = vld [vmem:[%s248 + $0x28] sm:$0xff]
        %v255 = vld [vmem:[%s248 + $0x30] sm:$0xff]
        %v256 = vld [vmem:[%s248 + $0x38] sm:$0xff]
        %v257 = vld [vmem:[%s248 + $0x40] sm:$0xff]
        %v258 = vld [vmem:[%s248 + $0x48] sm:$0xff]
        %v259 = vld [vmem:[%s248 + $0x50] sm:$0xff]
        %v260 = vld [vmem:[%s248 + $0x58] sm:$0xff]
        %v261 = vld [vmem:[%s248 + $0x60] sm:$0xff]
        %v262 = vld [vmem:[%s248 + $0x68] sm:$0xff]
        %v263 = vld [vmem:[%s248 + $0x70] sm:$0xff]
        %v264 = vld [vmem:[%s248 + $0x78] sm:$0xff]
        %s265 = scalar_lea.vmem %s1, 24
        %v266 = vld [vmem:[%s265] sm:$0xff]
        %v267 = vld [vmem:[%s265 + $0x8] sm:$0xff]
        %v268 = vld [vmem:[%s265 + $0x10] sm:$0xff]
        %vm269 = vcmask 130048
        %v271 = vsel %vm269, %v266, 0
        %v274 = vsel %vm269, %v267, 0
        %v277 = vsel %vm269, %v268, 0
        %v280 = vsel %vm269, %v249, 0
        %v283 = vsel %vm269, %v250, 0
        %v286 = vsel %vm269, %v251, 0
        %v289 = vsel %vm269, %v252, 0
        %v292 = vsel %vm269, %v253, 0
        %v295 = vsel %vm269, %v254, 0
        %v298 = vsel %vm269, %v255, 0
        %v301 = vsel %vm269, %v256, 0
        %v304 = vsel %vm269, %v257, 0
        %v307 = vsel %vm269, %v258, 0
        %v310 = vsel %vm269, %v259, 0
        %v313 = vsel %vm269, %v260, 0
        %v316 = vsel %vm269, %v261, 0
        %v319 = vsel %vm269, %v262, 0
        %v322 = vsel %vm269, %v263, 0
        %v325 = vsel %vm269, %v264, 0
        %327 = vmatpush.xpose.msra.mxu0 %v325
        %328 = vmatpush.xpose.msra.mxu0 %v322
        %329 = vmatpush.xpose.msra.mxu0 %v319
        %330 = vmatpush.xpose.msra.mxu0 %v316
        %331 = vmatpush.xpose.msra.mxu0 %v313
        %332 = vmatpush.xpose.msra.mxu0 %v310
        %333 = vmatpush.xpose.msra.mxu0 %v307
        %334 = vmatpush.xpose.msra.mxu0 %v304
        %335 = vmatpush.xpose.msra.mxu0 %v301
        %336 = vmatpush.xpose.msra.mxu0 %v298
        %337 = vmatpush.xpose.msra.mxu0 %v295
        %338 = vmatpush.xpose.msra.mxu0 %v292
        %339 = vmatpush.xpose.msra.mxu0 %v289
        %340 = vmatpush.xpose.msra.mxu0 %v286
        %341 = vmatpush.xpose.msra.mxu0 %v283
        %342 = vmatpush.xpose.msra.mxu0 %v280
        %343 = vmatmul.f32.gmra.mxu0 %v271
        %v344 = vpop.f32.mrf.mxu0
        %v345 = vadd.f32 0.0, %v344
        %346 = vmatmul.f32.gmra.mxu0 %v274
        %v347 = vpop.f32.mrf.mxu0
        %v348 = vadd.f32 0.0, %v347
        %349 = vmatmul.f32.gmra.mxu0 %v277
        %v350 = vpop.f32.mrf.mxu0
        %v351 = vadd.f32 0.0, %v350
        %352 = vdwg.mxu0
        %v354 = vsel %vm269, %v241, 0
        %v357 = vsel %vm269, %v242, 0
        %v360 = vsel %vm269, %v243, 0
        %v363 = vsel %vm269, %v225, 0
        %v366 = vsel %vm269, %v226, 0
        %v369 = vsel %vm269, %v227, 0
        %v372 = vsel %vm269, %v228, 0
        %v375 = vsel %vm269, %v229, 0
        %v378 = vsel %vm269, %v230, 0
        %v381 = vsel %vm269, %v231, 0
        %v384 = vsel %vm269, %v232, 0
        %v387 = vsel %vm269, %v233, 0
        %v390 = vsel %vm269, %v234, 0
        %v393 = vsel %vm269, %v235, 0
        %v396 = vsel %vm269, %v236, 0
        %v399 = vsel %vm269, %v237, 0
        %v402 = vsel %vm269, %v238, 0
        %v405 = vsel %vm269, %v239, 0
        %v408 = vsel %vm269, %v240, 0
        %410 = vmatpush.xpose.msra.mxu0 %v408
        %411 = vmatpush.xpose.msra.mxu0 %v405
        %412 = vmatpush.xpose.msra.mxu0 %v402
        %413 = vmatpush.xpose.msra.mxu0 %v399
        %414 = vmatpush.xpose.msra.mxu0 %v396
        %415 = vmatpush.xpose.msra.mxu0 %v393
        %416 = vmatpush.xpose.msra.mxu0 %v390
        %417 = vmatpush.xpose.msra.mxu0 %v387
        %418 = vmatpush.xpose.msra.mxu0 %v384
        %419 = vmatpush.xpose.msra.mxu0 %v381
        %420 = vmatpush.xpose.msra.mxu0 %v378
        %421 = vmatpush.xpose.msra.mxu0 %v375
        %422 = vmatpush.xpose.msra.mxu0 %v372
        %423 = vmatpush.xpose.msra.mxu0 %v369
        %424 = vmatpush.xpose.msra.mxu0 %v366
        %425 = vmatpush.xpose.msra.mxu0 %v363
        %426 = vmatmul.f32.gmra.mxu0 %v354
        %v427 = vpop.f32.mrf.mxu0
        %v428 = vadd.f32 %v345, %v427
        %429 = vmatmul.f32.gmra.mxu0 %v357
        %v430 = vpop.f32.mrf.mxu0
        %v431 = vadd.f32 %v348, %v430
        %432 = vmatmul.f32.gmra.mxu0 %v360
        %v433 = vpop.f32.mrf.mxu0
        %v434 = vadd.f32 %v351, %v433
        %435 = vdwg.mxu0
        %s436 = scalar_lea.vmem %s2, 24
        %v437 = vld [vmem:[%s436] sm:$0xff]
        %v438 = vld [vmem:[%s436 + $0x8] sm:$0xff]
        %v439 = vld [vmem:[%s436 + $0x10] sm:$0xff]
        %v441 = vsel %vm269, %v437, 0
        %v444 = vsel %vm269, %v438, 0
        %v447 = vsel %vm269, %v439, 0
        %449 = vmatpush.xpose.msra.mxu0 %v325
        %450 = vmatpush.xpose.msra.mxu0 %v322
        %451 = vmatpush.xpose.msra.mxu0 %v319
        %452 = vmatpush.xpose.msra.mxu0 %v316
        %453 = vmatpush.xpose.msra.mxu0 %v313
        %454 = vmatpush.xpose.msra.mxu0 %v310
        %455 = vmatpush.xpose.msra.mxu0 %v307
        %456 = vmatpush.xpose.msra.mxu0 %v304
        %457 = vmatpush.xpose.msra.mxu0 %v301
        %458 = vmatpush.xpose.msra.mxu0 %v298
        %459 = vmatpush.xpose.msra.mxu0 %v295
        %460 = vmatpush.xpose.msra.mxu0 %v292
        %461 = vmatpush.xpose.msra.mxu0 %v289
        %462 = vmatpush.xpose.msra.mxu0 %v286
        %463 = vmatpush.xpose.msra.mxu0 %v283
        %464 = vmatpush.xpose.msra.mxu0 %v280
        %465 = vmatmul.f32.gmra.mxu0 %v441
        %v466 = vpop.f32.mrf.mxu0
        %v467 = vadd.f32 0.0, %v466
        %468 = vmatmul.f32.gmra.mxu0 %v444
        %v469 = vpop.f32.mrf.mxu0
        %v470 = vadd.f32 0.0, %v469
        %471 = vmatmul.f32.gmra.mxu0 %v447
        %v472 = vpop.f32.mrf.mxu0
        %v473 = vadd.f32 0.0, %v472
        %474 = vdwg.mxu0
        %v476 = vsel %vm269, %v244, 0
        %v479 = vsel %vm269, %v245, 0
        %v482 = vsel %vm269, %v246, 0
        %484 = vmatpush.xpose.msra.mxu0 %v408
        %485 = vmatpush.xpose.msra.mxu0 %v405
        %486 = vmatpush.xpose.msra.mxu0 %v402
        %487 = vmatpush.xpose.msra.mxu0 %v399
        %488 = vmatpush.xpose.msra.mxu0 %v396
        %489 = vmatpush.xpose.msra.mxu0 %v393
        %490 = vmatpush.xpose.msra.mxu0 %v390
        %491 = vmatpush.xpose.msra.mxu0 %v387
        %492 = vmatpush.xpose.msra.mxu0 %v384
        %493 = vmatpush.xpose.msra.mxu0 %v381
        %494 = vmatpush.xpose.msra.mxu0 %v378
        %495 = vmatpush.xpose.msra.mxu0 %v375
        %496 = vmatpush.xpose.msra.mxu0 %v372
        %497 = vmatpush.xpose.msra.mxu0 %v369
        %498 = vmatpush.xpose.msra.mxu0 %v366
        %499 = vmatpush.xpose.msra.mxu0 %v363
        %500 = vmatmul.f32.gmra.mxu0 %v476
        %v501 = vpop.f32.mrf.mxu0
        %v502 = vadd.f32 %v467, %v501
        %503 = vmatmul.f32.gmra.mxu0 %v479
        %v504 = vpop.f32.mrf.mxu0
        %v505 = vadd.f32 %v470, %v504
        %506 = vmatmul.f32.gmra.mxu0 %v482
        %v507 = vpop.f32.mrf.mxu0
        %v508 = vadd.f32 %v473, %v507
        %509 = vdwg.mxu0
        %v510 = vmul.f32 %v428, %v428
        %v511 = vmul.f32 %v431, %v431
        %v512 = vmul.f32 %v434, %v434
        %v513 = vmul.f32 %v502, %v502
        %v514 = vmul.f32 %v505, %v505
        %v515 = vmul.f32 %v508, %v508
        %v516 = vadd.f32 %v510, %v513
        %v517 = vadd.f32 %v511, %v514
        %v518 = vadd.f32 %v512, %v515
        %v519 = vrsqrt.pop %v516
        %v520 = vmul.f32 %v519, %v516
        %v521 = vmul.f32 %v520, %v519
        %v522 = vmul.f32 0.5, %v521
        %v523 = vsub.f32 1.5, %v522
        %v524 = vmul.f32 %v519, %v523
        %v525 = vmul.f32 %v516, %v524
        %vm526 = vcmp.eq.f32.partialorder %v516, inf
        %v527 = vsel %vm526, %v516, %v525
        %vm528 = vcmp.eq.f32.partialorder %v516, 0.0
        %v529 = vand.u32 %v516, 2147483648
        %v530 = vsel %vm528, %v529, %v527
        %v531 = vrsqrt.pop %v517
        %v532 = vmul.f32 %v531, %v517
        %v533 = vmul.f32 %v532, %v531
        %v534 = vmul.f32 0.5, %v533
        %v535 = vsub.f32 1.5, %v534
        %v536 = vmul.f32 %v531, %v535
        %v537 = vmul.f32 %v517, %v536
        %vm538 = vcmp.eq.f32.partialorder %v517, inf
        %v539 = vsel %vm538, %v517, %v537
        %vm540 = vcmp.eq.f32.partialorder %v517, 0.0
        %v541 = vand.u32 %v517, 2147483648
        %v542 = vsel %vm540, %v541, %v539
        %v543 = vrsqrt.pop %v518
        %v544 = vmul.f32 %v543, %v518
        %v545 = vmul.f32 %v544, %v543
        %v546 = vmul.f32 0.5, %v545
        %v547 = vsub.f32 1.5, %v546
        %v548 = vmul.f32 %v543, %v547
        %v549 = vmul.f32 %v518, %v548
        %vm550 = vcmp.eq.f32.partialorder %v518, inf
        %v551 = vsel %vm550, %v518, %v549
        %vm552 = vcmp.eq.f32.partialorder %v518, 0.0
        %v553 = vand.u32 %v518, 2147483648
        %v554 = vsel %vm552, %v553, %v551
        %555 = vst [vmem:[%s210] sm:$0xff] %v530
        %556 = vst [vmem:[%s210 + $0x8] sm:$0xff] %v542
        %557 = vst [vmem:[%s210 + $0x10] sm:$0xff] %v554
        %v558 = vand.u32 2147483647, %v428
        %v559 = vand.u32 2147483647, %v431
        %v560 = vand.u32 2147483647, %v434
        %v561 = vand.u32 2147483647, %v502
        %v562 = vand.u32 2147483647, %v505
        %v563 = vand.u32 2147483647, %v508
        %v564 = vmax.f32 %v558, %v561
        %v565 = vmax.f32 %v559, %v562
        %v566 = vmax.f32 %v560, %v563
        %v567 = vmin.f32 %v558, %v561
        %v568 = vmin.f32 %v559, %v562
        %v569 = vmin.f32 %v560, %v563
        %vm570 = vcmp.gt.f32.partialorder %v564, 0.0
        %vm571 = vcmp.gt.f32.partialorder %v565, 0.0
        %vm572 = vcmp.gt.f32.partialorder %v566, 0.0
        %v573 = vrcp.pop %v564
        %v574 = vmul.f32 %v564, %v573
        %v575 = vsub.f32 1.0, %v574
        %v576 = vmul.f32 %v573, %v575
        %v577 = vadd.f32 %v573, %v576
        %vm578 = vweird.f32 %v564
        %vm579 = vweird.f32 %v573
        %vm580 = vmor %vm578, %vm579
        %v581 = vsel %vm580, %v573, %v577
        %v582 = vand.u32 2147483647, %v564
        %vm583 = vcmp.eq.f32.partialorder %v582, 8.507059e+37
        %v584 = vand.u32 %v564, 2147483648
        %v585 = vor.u32 1.1754944e-38, %v584
        %v586 = vsel %vm583, %v585, %v581
        %v587 = vmul.f32 %v567, %v586
        %v588 = vrcp.pop %v565
        %v589 = vmul.f32 %v565, %v588
        %v590 = vsub.f32 1.0, %v589
        %v591 = vmul.f32 %v588, %v590
        %v592 = vadd.f32 %v588, %v591
        %vm593 = vweird.f32 %v565
        %vm594 = vweird.f32 %v588
        %vm595 = vmor %vm593, %vm594
        %v596 = vsel %vm595, %v588, %v592
        %v597 = vand.u32 2147483647, %v565
        %vm598 = vcmp.eq.f32.partialorder %v597, 8.507059e+37
        %v599 = vand.u32 %v565, 2147483648
        %v600 = vor.u32 1.1754944e-38, %v599
        %v601 = vsel %vm598, %v600, %v596
        %v602 = vmul.f32 %v568, %v601
        %v603 = vrcp.pop %v566
        %v604 = vmul.f32 %v566, %v603
        %v605 = vsub.f32 1.0, %v604
        %v606 = vmul.f32 %v603, %v605
        %v607 = vadd.f32 %v603, %v606
        %vm608 = vweird.f32 %v566
        %vm609 = vweird.f32 %v603
        %vm610 = vmor %vm608, %vm609
        %v611 = vsel %vm610, %v603, %v607
        %v612 = vand.u32 2147483647, %v566
        %vm613 = vcmp.eq.f32.partialorder %v612, 8.507059e+37
        %v614 = vand.u32 %v566, 2147483648
        %v615 = vor.u32 1.1754944e-38, %v614
        %v616 = vsel %vm613, %v615, %v611
        %v617 = vmul.f32 %v569, %v616
        %v618 = vsel %vm570, %v587, 0.0
        %v619 = vsel %vm571, %v602, 0.0
        %v620 = vsel %vm572, %v617, 0.0
        %v621 = vmul.f32 %v618, %v618
        %v622 = vmul.f32 %v619, %v619
        %v623 = vmul.f32 %v620, %v620
        %v624 = vmul.f32 %v621, 0.0208351
        %v625 = vmul.f32 %v622, 0.0208351
        %v626 = vmul.f32 %v623, 0.0208351
        %v627 = vadd.f32 %v624, -0.085133
        %v628 = vadd.f32 %v625, -0.085133
        %v629 = vadd.f32 %v626, -0.085133
        %v630 = vmul.f32 %v627, %v621
        %v631 = vmul.f32 %v628, %v622
        %v632 = vmul.f32 %v629, %v623
        %v633 = vadd.f32 %v630, 0.180141
        %v634 = vadd.f32 %v631, 0.180141
        %v635 = vadd.f32 %v632, 0.180141
        %v636 = vmul.f32 %v633, %v621
        %v637 = vmul.f32 %v634, %v622
        %v638 = vmul.f32 %v635, %v623
        %v639 = vadd.f32 %v636, -0.3302995
        %v640 = vadd.f32 %v637, -0.3302995
        %v641 = vadd.f32 %v638, -0.3302995
        %v642 = vmul.f32 %v639, %v621
        %v643 = vmul.f32 %v640, %v622
        %v644 = vmul.f32 %v641, %v623
        %v645 = vadd.f32 %v642, 0.999866
        %v646 = vadd.f32 %v643, 0.999866
        %v647 = vadd.f32 %v644, 0.999866
        %v648 = vmul.f32 %v618, %v645
        %v649 = vmul.f32 %v619, %v646
        %v650 = vmul.f32 %v620, %v647
        %vm651 = vcmp.gt.f32.partialorder %v561, %v558
        %vm652 = vcmp.gt.f32.partialorder %v562, %v559
        %vm653 = vcmp.gt.f32.partialorder %v563, %v560
        %v654 = vsub.f32 1.5707964, %v648
        %v655 = vsub.f32 1.5707964, %v649
        %v656 = vsub.f32 1.5707964, %v650
        %v657 = vsel %vm651, %v654, %v648
        %v658 = vsel %vm652, %v655, %v649
        %v659 = vsel %vm653, %v656, %v650
        %vm660 = vcmp.lt.f32.partialorder %v428, 0.0
        %vm661 = vcmp.lt.f32.partialorder %v431, 0.0
        %vm662 = vcmp.lt.f32.partialorder %v434, 0.0
        %v663 = vsub.f32 3.1415927, %v657
        %v664 = vsub.f32 3.1415927, %v658
        %v665 = vsub.f32 3.1415927, %v659
        %v666 = vsel %vm660, %v663, %v657
        %v667 = vsel %vm661, %v664, %v658
        %v668 = vsel %vm662, %v665, %v659
        %vm669 = vcmp.lt.f32.partialorder %v502, 0.0
        %vm670 = vcmp.lt.f32.partialorder %v505, 0.0
        %vm671 = vcmp.lt.f32.partialorder %v508, 0.0
        %v672 = vsub.f32 0.0, %v666
        %v673 = vsub.f32 0.0, %v667
        %v674 = vsub.f32 0.0, %v668
        %v675 = vsel %vm669, %v672, %v666
        %v676 = vsel %vm670, %v673, %v667
        %v677 = vsel %vm671, %v674, %v668
        %678 = vst [vmem:[%s217] sm:$0xff] %v675
        %679 = vst [vmem:[%s217 + $0x8] sm:$0xff] %v676
        %680 = vst [vmem:[%s217 + $0x10] sm:$0xff] %v677
        %s681 = sand.u32 %s112, 1
        %s682 = scalar_lea.sflag [#allocation3], %s681
        %s683 = sand.u32 %s112, 1
        %s684 = smul.addr %s683, 24
        %s685 = scalar_lea.vmem [#allocation2], %s684
        %s686 = sand.u32 %s140, 1
        %s687 = scalar_lea.sflag [#allocation5], %s686
        %s688 = sand.u32 %s140, 1
        %s689 = smul.addr %s688, 24
        %s690 = scalar_lea.vmem [#allocation4], %s689
        // Predicated region
        $region33: #{tpu_custom_call.1} parent=31 // pred_check
          %p691 = pneg %p122
        $region34: #{tpu_custom_call.1} parent=31 // pred_check_branch
          %693 = sbr.rel (%p691) target = $region36
        $region35: #{tpu_custom_call.1} parent=31 // pred_region
          %695 = vsyncadd %s682, 0
          %s696 = smul.addr %s26, 3
          %s697 = sadd.s32 %s27, %s696
          %s698 = smul.addr %s697, 8
          %s699 = scalar_lea.hbm %s3, %s698
          %s700 = sshll.u32 %s685, 4
          %s701 = int_to_ptr.vmem [resolvable:$true] %s700
          %s702 = sshll.u32 %s699, 4
          %s703 = int_to_ptr.hbm [resolvable:$true] %s702
          %708 = dma.vmem_to_hbm [thread:$0]  %s701, 384, %s703, %s682, 128, 128, 8
        $region36: #{tpu_custom_call.1} parent=31 // pred_fallthru
          _
        // Predicated region
        $region37: #{tpu_custom_call.1} parent=31 // pred_check
          %p709 = pneg %p150
        $region38: #{tpu_custom_call.1} parent=31 // pred_check_branch
          %711 = sbr.rel (%p709) target = $region40
        $region39: #{tpu_custom_call.1} parent=31 // pred_region
          %713 = vsyncadd %s687, 0
          %s714 = smul.addr %s26, 3
          %s715 = sadd.s32 %s27, %s714
          %s716 = smul.addr %s715, 8
          %s717 = scalar_lea.hbm %s4, %s716
          %s718 = sshll.u32 %s690, 4
          %s719 = int_to_ptr.vmem [resolvable:$true] %s718
          %s720 = sshll.u32 %s717, 4
          %s721 = int_to_ptr.hbm [resolvable:$true] %s720
          %726 = dma.vmem_to_hbm [thread:$0]  %s719, 384, %s721, %s687, 128, 128, 8
        $region40: #{tpu_custom_call.1} parent=31 // pred_fallthru
          _
      $region32: #{tpu_custom_call.1} parent=5 // pred_fallthru
        _
      %p727 = scmp.le.s32.totalorder 2, %s17
      // Predicated region
      $region41: #{tpu_custom_call.1} parent=5 // pred_check
        %p728 = pneg %p727
      $region42: #{tpu_custom_call.1} parent=5 // pred_check_branch
        %730 = sbr.rel (%p728) target = $region44
      $region43: #{tpu_custom_call.1} parent=5 // pred_region
        %s731 = ssub.s32 %s17, 2
        // Predicated region
        $region45: #{tpu_custom_call.1} parent=43 // pred_check
          %p732 = pneg %p128
        $region46: #{tpu_custom_call.1} parent=43 // pred_check_branch
          %734 = sbr.rel (%p732) target = $region48
        $region47: #{tpu_custom_call.1} parent=43 // pred_region
          %s735 = sand.u32 %s113, 1
          %s736 = scalar_lea.sflag [#allocation3], %s735
          %s737 = sand.u32 %s113, 1
          %s738 = smul.addr %s737, 24
          %s739 = scalar_lea.vmem [#allocation2], %s738
          %741 = dma.done %s736, 384
        $region48: #{tpu_custom_call.1} parent=43 // pred_fallthru
          _
        // Predicated region
        $region49: #{tpu_custom_call.1} parent=43 // pred_check
          %p742 = pneg %p156
        $region50: #{tpu_custom_call.1} parent=43 // pred_check_branch
          %744 = sbr.rel (%p742) target = $region52
        $region51: #{tpu_custom_call.1} parent=43 // pred_region
          %s745 = sand.u32 %s141, 1
          %s746 = scalar_lea.sflag [#allocation5], %s745
          %s747 = sand.u32 %s141, 1
          %s748 = smul.addr %s747, 24
          %s749 = scalar_lea.vmem [#allocation4], %s748
          %751 = dma.done %s746, 384
        $region52: #{tpu_custom_call.1} parent=43 // pred_fallthru
          _
      $region44: #{tpu_custom_call.1} parent=5 // pred_fallthru
        _
    $region6: #{tpu_custom_call.1} parent=1 // loop_footer
      %s21 = sadd.s32 1, %s17
    $region7: #{tpu_custom_call.1} parent=1 // loop_footer_branch
      %16 = sbr.rel target = $region3
    $region8: #{tpu_custom_call.1} parent=1 // loop_exit
      _
    %752 = vsyncpa [#allocation3], 1
    %s753 = scalar_lea.sflag [#allocation3], 1
    %754 = vsyncpa %s753, 1
    %755 = vsyncpa [#allocation5], 1
    %s756 = scalar_lea.sflag [#allocation5], 1
    %757 = vsyncpa %s756, 1

</llo_original>
